<compile_context>
chip_gen: v7x
topology: tpu7x:2x2x1
jax: 0.10.0
libtpu: 0.0.40
codegen_flags: <defaults>
</compile_context>

<pallas_src>
import functools

import jax
import jax.numpy as jnp
from jax import lax
from jax.experimental import pallas as pl
from jax.experimental.pallas import tpu as pltpu


def _choose_tile(total, want, align):
    """Largest tile <= want that divides `total` and is a multiple of `align`
    (falls back to the full extent, which is always a legal block size)."""
    if total <= want:
        return total
    t = (min(want, total) // align) * align
    while t >= align:
        if total % t == 0:
            return t
        t -= align
    return total


def _projected_adaptor_kernel(state_ref, steer_ref, p1_ref, p2_ref, w_ref,
                              out_ref, proj_ref, *, epsilon):
    # Grid = (i over M tiles [parallel], j over vocab tiles [arbitrary]).
    #
    # CORRECTNESS NOTE: the proj_ref caching below is only valid because the
    # vocab axis j is the innermost, sequentially executed ("arbitrary") axis
    # on a single core for a fixed i.  Do not mark it "parallel" or reorder
    # the grid.
    @pl.when(pl.program_id(1) == 0)
    def _():
        state = state_ref[...].astype(jnp.float32)                # (tm, D)
        # Fused low-rank projection: h = state @ P1_fused, scaled per-row by
        # the rank-expanded steer values, then delta = h @ P2_fused.
        h = jnp.dot(state, p1_ref[...],
                    preferred_element_type=jnp.float32)           # (tm, S*r)
        h = h * steer_ref[...]                                    # per-row steer scale
        delta = jnp.dot(h, p2_ref[...],
                        preferred_element_type=jnp.float32)       # (tm, D)
        proj_ref[...] = (state + jnp.float32(epsilon) * delta).astype(proj_ref.dtype)

    # logits tile = proj @ W_tile^T -- contract dim 1 of both operands so the
    # MXU consumes the lm_head weight tile in its native layout and dtype
    # (no in-kernel transpose, no per-step up-cast).
    out_ref[...] = lax.dot_general(
        proj_ref[...], w_ref[...],
        dimension_numbers=(((1,), (1,)), ((), ())),
        preferred_element_type=jnp.float32).astype(out_ref.dtype)


def projected_adaptor_forward(state, steer_values, projector1, projector2,
                              lm_head_weight, epsilon, *, tm=256, tv=512):
    """state: (B, T, D); steer_values: (B, num_steers);
    projector1/2: (num_steers, D, rank); lm_head_weight: (V, D).
    Returns logits: (B, T, V)."""
    B, T, D = state.shape
    num_steers, _, rank = projector1.shape
    V = lm_head_weight.shape[0]
    M = B * T
    sr = num_steers * rank

    tm = _choose_tile(M, tm, 8)
    tv = _choose_tile(V, tv, 128)
    assert M % tm == 0 and V % tv == 0

    state2d = state.reshape(M, D)

    # Steer broadcast: rows follow the (B, T) row-major flatten of state,
    # columns follow the (steer, rank) flatten of the fused projectors.
    steer_exp = jnp.repeat(steer_values.astype(jnp.float32), rank, axis=1)  # (B, S*r)
    steer_exp = jnp.repeat(steer_exp, T, axis=0)                            # (M, S*r)

    # Fused projector matrices (tiny; built & cast once outside the kernel).
    p1_fused = jnp.transpose(projector1, (1, 0, 2)).reshape(D, sr).astype(jnp.float32)
    p2_fused = jnp.transpose(projector2, (0, 2, 1)).reshape(sr, D).astype(jnp.float32)

    kernel = functools.partial(_projected_adaptor_kernel, epsilon=float(epsilon))

    grid_spec = pltpu.PrefetchScalarGridSpec(
        num_scalar_prefetch=0,
        grid=(M // tm, V // tv),
        in_specs=[
            pl.BlockSpec((tm, D), lambda i, j: (i, 0)),        # state tile
            pl.BlockSpec((tm, sr), lambda i, j: (i, 0)),       # rank-expanded steer
            pl.BlockSpec((D, sr), lambda i, j: (0, 0)),        # fused projector1
            pl.BlockSpec((sr, D), lambda i, j: (0, 0)),        # fused projector2
            pl.BlockSpec((tv, D), lambda i, j: (j, 0)),        # lm_head weight tile
        ],
        out_specs=pl.BlockSpec((tm, tv), lambda i, j: (i, j)),
        # Projected state cached across the vocab axis for each M tile.
        scratch_shapes=[pltpu.VMEM((tm, D), lm_head_weight.dtype)],
    )

    # Rough VMEM budget; only raise the scoped limit when the tiles need it
    # (stays well under v7x's 64 MiB physical VMEM).
    w_item = jnp.dtype(lm_head_weight.dtype).itemsize
    s_item = jnp.dtype(state.dtype).itemsize
    est = 2 * (tm * D * s_item + tv * D * w_item + tm * tv * s_item + tm * sr * 4)
    est += tm * D * w_item + (D * sr + sr * D) * 4
    cp = {"dimension_semantics": ("parallel", "arbitrary")}
    if est > 16 * 2**20:
        cp["vmem_limit_bytes"] = min(int(1.5 * est) + (1 << 20), 64 * 2**20)

    out2d = pl.pallas_call(
        kernel,
        out_shape=jax.ShapeDtypeStruct((M, V), state.dtype),
        grid_spec=grid_spec,
        compiler_params=pltpu.CompilerParams(**cp),
    )(state2d, steer_exp, p1_fused, p2_fused, lm_head_weight)

    return out2d.reshape(B, T, V)


def projected_adaptor_reference(state, steer_values, projector1, projector2,
                                lm_head_weight, epsilon):
    # Pure-JAX transcription of the PyTorch forward (non-inference branch).
    h = jnp.einsum('btd,sdr->bstr', state, projector1)
    h = h * steer_values[:, :, None, None]
    delta = jnp.einsum('bstr,sdr->bstd', h, projector2).sum(axis=1)
    projected = state + epsilon * delta
    return jnp.einsum('btd,vd->btv', projected, lm_head_weight)


if __name__ == "__main__":
    epsilon = 1e-3
    init_var = 1e-2
    key = jax.random.PRNGKey(0)

    # --- Check 1: small shapes, single grid tile (default tile selection). ---
    B, T, D = 2, 8, 32
    num_steers, rank = 2, 4
    V = 256
    k1, k2, k3, k4, k5 = jax.random.split(key, 5)
    projector1 = jax.random.normal(k1, (num_steers, D, rank), jnp.float32) * init_var
    projector2 = jax.random.normal(k2, (num_steers, D, rank), jnp.float32) * init_var
    lm_head_weight = jax.random.normal(k3, (V, D), jnp.float32) * 0.02
    state = jax.random.normal(k4, (B, T, D), jnp.float32)
    steer_values = jax.random.normal(k5, (B, num_steers), jnp.float32)

    logits = projected_adaptor_forward(state, steer_values, projector1,
                                       projector2, lm_head_weight, epsilon)
    logits = jax.block_until_ready(logits)
    ref = projected_adaptor_reference(state, steer_values, projector1,
                                      projector2, lm_head_weight, epsilon)
    assert logits.shape == (B, T, V)
    assert jnp.allclose(logits, ref, atol=1e-4, rtol=1e-4)

    # --- Check 2: force multiple M and vocab tiles to exercise the grid /
    #     proj_ref caching path (tm/tv passed explicitly, still small). ---
    B2, T2, V2 = 2, 16, 512
    k6, k7, k8 = jax.random.split(k5, 3)
    state2 = jax.random.normal(k6, (B2, T2, D), jnp.float32)
    steer2 = jax.random.normal(k7, (B2, num_steers), jnp.float32)
    w2 = jax.random.normal(k8, (V2, D), jnp.float32) * 0.02

    logits2 = projected_adaptor_forward(state2, steer2, projector1,
                                        projector2, w2, epsilon, tm=16, tv=128)
    logits2 = jax.block_until_ready(logits2)
    ref2 = projected_adaptor_reference(state2, steer2, projector1,
                                       projector2, w2, epsilon)
    assert logits2.shape == (B2, T2, V2)
    assert jnp.allclose(logits2, ref2, atol=1e-4, rtol=1e-4)

    print("KERNEL_OK")
</pallas_src>

<mosaic_0001>
module attributes {stable_mosaic.version = 11 : i64} {
  func.func @_projected_adaptor_kernel(%arg0: i32, %arg1: i32, %arg2: memref<16x32xf32, #tpu.memory_space<vmem>>, %arg3: memref<16x8xf32, #tpu.memory_space<vmem>>, %arg4: memref<32x8xf32, #tpu.memory_space<vmem>>, %arg5: memref<8x32xf32, #tpu.memory_space<vmem>>, %arg6: memref<256x32xf32, #tpu.memory_space<vmem>>, %arg7: memref<16x256xf32, #tpu.memory_space<vmem>>, %arg8: memref<16x32xf32, #tpu.memory_space<vmem>>) attributes {dimension_semantics = [#tpu.dimension_semantics<parallel>, #tpu.dimension_semantics<arbitrary>], iteration_bounds = array<i64: 1, 1>, scalar_prefetch = 0 : i64, scratch_operands = 1 : i64, tpu.core_type = #tpu.core_type<tc>, window_params = [{transform_indices = @transform_0, window_bounds = array<i64: 16, 32>}, {transform_indices = @transform_1, window_bounds = array<i64: 16, 8>}, {pipeline_mode = #tpu.pipeline_mode<synchronous>, transform_indices = @transform_2, window_bounds = array<i64: 32, 8>}, {pipeline_mode = #tpu.pipeline_mode<synchronous>, transform_indices = @transform_3, window_bounds = array<i64: 8, 32>}, {transform_indices = @transform_4, window_bounds = array<i64: 256, 32>}, {transform_indices = @transform_5, window_bounds = array<i64: 16, 256>}]} {
    %c0_i32 = arith.constant 0 : i32
    %0 = arith.cmpi eq, %arg1, %c0_i32 : i32
    %1 = arith.extui %0 : i1 to i32
    %c0_i32_0 = arith.constant 0 : i32
    %2 = arith.cmpi ne, %1, %c0_i32_0 : i32
    scf.if %2 {
      %c0_6 = arith.constant 0 : index
      %c0_7 = arith.constant 0 : index
      %7 = vector.load %arg2[%c0_6, %c0_7] : memref<16x32xf32, #tpu.memory_space<vmem>>, vector<16x32xf32>
      %c0_8 = arith.constant 0 : index
      %c0_9 = arith.constant 0 : index
      %8 = vector.load %arg4[%c0_8, %c0_9] : memref<32x8xf32, #tpu.memory_space<vmem>>, vector<32x8xf32>
      %cst_10 = arith.constant dense<0.000000e+00> : vector<16x8xf32>
      %9 = tpu.matmul %7, %8, %cst_10 {dimension_numbers = #tpu.dot_dimension_numbers<[1], [0], [0], [1], [0, 0, 1, 1], [], []>} : vector<16x32xf32>, vector<32x8xf32>, vector<16x8xf32> -> vector<16x8xf32>
      %c0_11 = arith.constant 0 : index
      %c0_12 = arith.constant 0 : index
      %10 = vector.load %arg3[%c0_11, %c0_12] : memref<16x8xf32, #tpu.memory_space<vmem>>, vector<16x8xf32>
      %11 = arith.mulf %9, %10 : vector<16x8xf32>
      %c0_13 = arith.constant 0 : index
      %c0_14 = arith.constant 0 : index
      %12 = vector.load %arg5[%c0_13, %c0_14] : memref<8x32xf32, #tpu.memory_space<vmem>>, vector<8x32xf32>
      %cst_15 = arith.constant dense<0.000000e+00> : vector<16x32xf32>
      %13 = tpu.matmul %11, %12, %cst_15 {dimension_numbers = #tpu.dot_dimension_numbers<[1], [0], [0], [1], [0, 0, 1, 1], [], []>} : vector<16x8xf32>, vector<8x32xf32>, vector<16x32xf32> -> vector<16x32xf32>
      %cst_16 = arith.constant 1.000000e-03 : f32
      %14 = vector.broadcast %cst_16 : f32 to vector<16x32xf32>
      %15 = arith.mulf %14, %13 : vector<16x32xf32>
      %16 = arith.addf %7, %15 : vector<16x32xf32>
      %c0_17 = arith.constant 0 : index
      %c0_18 = arith.constant 0 : index
      %17 = vector.load %arg8[%c0_17, %c0_18] : memref<16x32xf32, #tpu.memory_space<vmem>>, vector<16x32xf32>
      tpu.vector_store %arg8[%c0_17, %c0_18], %16 {strides = array<i32>} : memref<16x32xf32, #tpu.memory_space<vmem>>, vector<16x32xf32>,
    } else {
    }
    %c0 = arith.constant 0 : index
    %c0_1 = arith.constant 0 : index
    %3 = vector.load %arg8[%c0, %c0_1] : memref<16x32xf32, #tpu.memory_space<vmem>>, vector<16x32xf32>
    %c0_2 = arith.constant 0 : index
    %c0_3 = arith.constant 0 : index
    %4 = vector.load %arg6[%c0_2, %c0_3] : memref<256x32xf32, #tpu.memory_space<vmem>>, vector<256x32xf32>
    %cst = arith.constant dense<0.000000e+00> : vector<16x256xf32>
    %5 = tpu.matmul %3, %4, %cst {dimension_numbers = #tpu.dot_dimension_numbers<[1], [1], [0], [0], [0, 0, 1, 0], [], []>} : vector<16x32xf32>, vector<256x32xf32>, vector<16x256xf32> -> vector<16x256xf32>
    %c0_4 = arith.constant 0 : index
    %c0_5 = arith.constant 0 : index
    %6 = vector.load %arg7[%c0_4, %c0_5] : memref<16x256xf32, #tpu.memory_space<vmem>>, vector<16x256xf32>
    tpu.vector_store %arg7[%c0_4, %c0_5], %5 {strides = array<i32>} : memref<16x256xf32, #tpu.memory_space<vmem>>, vector<16x256xf32>,
    return
  }
  func.func @transform_0(%arg0: i32, %arg1: i32) -> (i32, i32) {
    %c0_i32 = arith.constant 0 : i32
    %c0_i32_0 = arith.constant 0 : i32
    return %arg0, %c0_i32 : i32, i32
  }
  func.func @transform_1(%arg0: i32, %arg1: i32) -> (i32, i32) {
    %c0_i32 = arith.constant 0 : i32
    %c0_i32_0 = arith.constant 0 : i32
    return %arg0, %c0_i32 : i32, i32
  }
  func.func @transform_2(%arg0: i32, %arg1: i32) -> (i32, i32) {
    %c0_i32 = arith.constant 0 : i32
    %c0_i32_0 = arith.constant 0 : i32
    %c0_i32_1 = arith.constant 0 : i32
    return %c0_i32, %c0_i32_0 : i32, i32
  }
  func.func @transform_3(%arg0: i32, %arg1: i32) -> (i32, i32) {
    %c0_i32 = arith.constant 0 : i32
    %c0_i32_0 = arith.constant 0 : i32
    %c0_i32_1 = arith.constant 0 : i32
    return %c0_i32, %c0_i32_0 : i32, i32
  }
  func.func @transform_4(%arg0: i32, %arg1: i32) -> (i32, i32) {
    %c0_i32 = arith.constant 0 : i32
    %c0_i32_0 = arith.constant 0 : i32
    return %arg1, %c0_i32 : i32, i32
  }
  func.func @transform_5(%arg0: i32, %arg1: i32) -> (i32, i32) {
    %c0_i32 = arith.constant 0 : i32
    return %arg0, %arg1 : i32, i32
  }
}

</mosaic_0001>

<llo_original>
// kernel: tpu_custom_call.1
$region0: #{tpu_custom_call.1}
  #allocation0 [shape = 'u32[]', space=smem, size = 0x4, offset = 0x4, fixed_abs, tag = 'smem constant byte address 0x4 - core index']
  #allocation1 [shape = 'u32[144,128]{1,0:T(1,128)}', space=vmem, size = 0x12000, scoped, tag = 'internal scratch']
  #allocation2 [shape = 'f32[16,32]{1,0:T(8,128)}', space=vmem, size = 0x2000, scoped, tag = 'scratch operand']
  %s0 = inlined_call_operand.vmem [shape: f32[16,32], index: 0, kind: input, shape index: {}]
  %s1 = inlined_call_operand.vmem [shape: f32[16,8], index: 1, kind: input, shape index: {}]
  %s2 = inlined_call_operand.vmem [shape: f32[32,8], index: 2, kind: input, shape index: {}]
  %s3 = inlined_call_operand.vmem [shape: f32[8,32], index: 3, kind: input, shape index: {}]
  %s4 = inlined_call_operand.vmem [shape: f32[256,32], index: 4, kind: input, shape index: {}]
  %s5 = inlined_call_operand.hbm [shape: f32[16,256], index: 5, kind: output, shape index: {}]
  %s6 = sld [smem:[#allocation0]]
  $region34: #{tpu_custom_call.1} parent=0
    _
  %s8 = ssub.s32 1, %s6
  %s9 = scalar_select 0, %s8, %s6
  $region1: #{tpu_custom_call.1} parent=0
    #allocation3 [shape = 'u8[16384]{0}', space=vmem, size = 0x4000, scoped, tag = 'output window, operand 0, single buffered']
    #allocation4 [shape = 's32[1]{0}', space=sflag, size = 0x4, scoped, tag = 'scoped memory for tpu_custom_call.1']
    %10 = vsyncpa [#allocation4], 0
    // Predicated region
    $region2: #{tpu_custom_call.1} parent=1 // pred_check
      _
    $region3: #{tpu_custom_call.1} parent=1 // pred_check_branch
      %12 = sbr.rel (0) target = $region5
    $region4: #{tpu_custom_call.1} parent=1 // pred_region
      _
    $region5: #{tpu_custom_call.1} parent=1 // pred_fallthru
      _
    // Predicated region
    $region6: #{tpu_custom_call.1} parent=1 // pred_check
      _
    $region7: #{tpu_custom_call.1} parent=1 // pred_check_branch
      %14 = sbr.rel (0) target = $region9
    $region8: #{tpu_custom_call.1} parent=1 // pred_region
      _
    $region9: #{tpu_custom_call.1} parent=1 // pred_fallthru
      _
    // Predicated region
    $region10: #{tpu_custom_call.1} parent=1 // pred_check
      _
    $region11: #{tpu_custom_call.1} parent=1 // pred_check_branch
      %16 = sbr.rel (0) target = $region13
    $region12: #{tpu_custom_call.1} parent=1 // pred_region
      _
    $region13: #{tpu_custom_call.1} parent=1 // pred_fallthru
      _
    // Predicated region
    $region14: #{tpu_custom_call.1} parent=1 // pred_check
      _
    $region15: #{tpu_custom_call.1} parent=1 // pred_check_branch
      %18 = sbr.rel (0) target = $region17
    $region16: #{tpu_custom_call.1} parent=1 // pred_region
      _
    $region17: #{tpu_custom_call.1} parent=1 // pred_fallthru
      _
    // Predicated region
    $region18: #{tpu_custom_call.1} parent=1 // pred_check
      _
    $region19: #{tpu_custom_call.1} parent=1 // pred_check_branch
      %20 = sbr.rel (0) target = $region21
    $region20: #{tpu_custom_call.1} parent=1 // pred_region
      _
    $region21: #{tpu_custom_call.1} parent=1 // pred_fallthru
      _
    %p21 = scmp.eq.s32.totalorder 0, 0
    // Predicated region
    $region22: #{tpu_custom_call.1} parent=1 // pred_check
      %p22 = pneg %p21
    $region23: #{tpu_custom_call.1} parent=1 // pred_check_branch
      %24 = sbr.rel (%p22) target = $region25
    $region24: #{tpu_custom_call.1} parent=1 // pred_region
      %v25 = vld [vmem:[%s0] sm:$0xff]
      %v26 = vld [vmem:[%s0 + $0x8] sm:$0xff]
      %v27 = vld [vmem:[%s2] sm:$0xff]
      %v28 = vld [vmem:[%s2 + $0x8] sm:$0xff]
      %v29 = vld [vmem:[%s2 + $0x10] sm:$0xff]
      %v30 = vld [vmem:[%s2 + $0x18] sm:$0xff]
      %vm31 = vcmask 261120
      %v33 = vsel %vm31, %v25, 0
      %v36 = vsel %vm31, %v26, 0
      %38 = vmatprep.subr.mxu0 0.0
      %39 = vmatpush1.msra.mxu0 %v27
      %40 = vmatprep.subr.mxu0 0.0
      %41 = vmatpush1.msra.mxu0 %v28
      %42 = vmatprep.subr.mxu0 0.0
      %43 = vmatpush1.msra.mxu0 %v29
      %44 = vmatprep.subr.mxu0 0.0
      %45 = vmatpush1.msra.mxu0 %v30
      %46 = vmatprep.subr.mxu0 0.0
      %47 = vmatpush1.msra.mxu0 0.0
      %48 = vmatprep.subr.mxu0 0.0
      %49 = vmatpush1.msra.mxu0 0.0
      %50 = vmatprep.subr.mxu0 0.0
      %51 = vmatpush1.msra.mxu0 0.0
      %52 = vmatprep.subr.mxu0 0.0
      %53 = vmatpush1.msra.mxu0 0.0
      %54 = vmatprep.subr.mxu0 0.0
      %55 = vmatpush1.msra.mxu0 0.0
      %56 = vmatprep.subr.mxu0 0.0
      %57 = vmatpush1.msra.mxu0 0.0
      %58 = vmatprep.subr.mxu0 0.0
      %59 = vmatpush1.msra.mxu0 0.0
      %60 = vmatprep.subr.mxu0 0.0
      %61 = vmatpush1.msra.mxu0 0.0
      %62 = vmatprep.subr.mxu0 0.0
      %63 = vmatpush1.msra.mxu0 0.0
      %64 = vmatprep.subr.mxu0 0.0
      %65 = vmatpush1.msra.mxu0 0.0
      %66 = vmatprep.subr.mxu0 0.0
      %67 = vmatpush1.msra.mxu0 0.0
      %68 = vmatprep.subr.mxu0 0.0
      %69 = vmatpush1.msra.mxu0 0.0
      %70 = vmatprep.subr.mxu0 0.0
      %71 = vmatpush1.msra.mxu0 0.0
      %72 = vmatprep.subr.mxu0 0.0
      %73 = vmatpush1.msra.mxu0 0.0
      %74 = vmatprep.subr.mxu0 0.0
      %75 = vmatpush1.msra.mxu0 0.0
      %76 = vmatprep.subr.mxu0 0.0
      %77 = vmatpush1.msra.mxu0 0.0
      %78 = vmatprep.subr.mxu0 0.0
      %79 = vmatpush1.msra.mxu0 0.0
      %80 = vmatprep.subr.mxu0 0.0
      %81 = vmatpush1.msra.mxu0 0.0
      %82 = vmatprep.subr.mxu0 0.0
      %83 = vmatpush1.msra.mxu0 0.0
      %84 = vmatprep.subr.mxu0 0.0
      %85 = vmatpush1.msra.mxu0 0.0
      %86 = vmatprep.subr.mxu0 0.0
      %87 = vmatpush1.msra.mxu0 0.0
      %88 = vmatprep.subr.mxu0 0.0
      %89 = vmatpush1.msra.mxu0 0.0
      %90 = vmatprep.subr.mxu0 0.0
      %91 = vmatpush1.msra.mxu0 0.0
      %92 = vmatprep.subr.mxu0 0.0
      %93 = vmatpush1.msra.mxu0 0.0
      %94 = vmatprep.subr.mxu0 0.0
      %95 = vmatpush1.msra.mxu0 0.0
      %96 = vmatprep.subr.mxu0 0.0
      %97 = vmatpush1.msra.mxu0 0.0
      %98 = vmatprep.subr.mxu0 0.0
      %99 = vmatpush1.msra.mxu0 0.0
      %100 = vmatprep.subr.mxu0 0.0
      %101 = vmatpush1.msra.mxu0 0.0
      %102 = vmatprep.mubr.f32.mxu0 0.0
      %103 = vmatmul.mubr.f32.gmra.mrb[0].mxu0 %v33
      %v104 = vpop.f32.mrb[0].mxu0
      %v105 = vadd.f32 0.0, %v104
      %v106 = vpop.f32.mrb[0].mxu0
      %107 = vmatprep.mubr.f32.mxu0 0.0
      %108 = vmatmul.mubr.f32.gmra.mrb[0].mxu0 %v36
      %v109 = vpop.f32.mrb[0].mxu0
      %v110 = vadd.f32 0.0, %v109
      %v111 = vpop.f32.mrb[0].mxu0
      %112 = vdwg.mxu0
      %v113 = vld [vmem:[%s1] sm:$0xff]
      %v114 = vld [vmem:[%s1 + $0x8] sm:$0xff]
      %v115 = vmul.f32 %v105, %v113
      %v116 = vmul.f32 %v110, %v114
      %v117 = vld [vmem:[%s3] sm:$0xff]
      %vm118 = vcmask 64512
      %v120 = vsel %vm118, %v115, 0
      %v123 = vsel %vm118, %v116, 0
      %125 = vmatprep.subr.mxu0 0.0
      %126 = vmatpush1.msra.mxu0 %v117
      %127 = vmatprep.subr.mxu0 0.0
      %128 = vmatpush1.msra.mxu0 0.0
      %129 = vmatprep.subr.mxu0 0.0
      %130 = vmatpush1.msra.mxu0 0.0
      %131 = vmatprep.subr.mxu0 0.0
      %132 = vmatpush1.msra.mxu0 0.0
      %133 = vmatprep.subr.mxu0 0.0
      %134 = vmatpush1.msra.mxu0 0.0
      %135 = vmatprep.subr.mxu0 0.0
      %136 = vmatpush1.msra.mxu0 0.0
      %137 = vmatprep.subr.mxu0 0.0
      %138 = vmatpush1.msra.mxu0 0.0
      %139 = vmatprep.subr.mxu0 0.0
      %140 = vmatpush1.msra.mxu0 0.0
      %141 = vmatprep.subr.mxu0 0.0
      %142 = vmatpush1.msra.mxu0 0.0
      %143 = vmatprep.subr.mxu0 0.0
      %144 = vmatpush1.msra.mxu0 0.0
      %145 = vmatprep.subr.mxu0 0.0
      %146 = vmatpush1.msra.mxu0 0.0
      %147 = vmatprep.subr.mxu0 0.0
      %148 = vmatpush1.msra.mxu0 0.0
      %149 = vmatprep.subr.mxu0 0.0
      %150 = vmatpush1.msra.mxu0 0.0
      %151 = vmatprep.subr.mxu0 0.0
      %152 = vmatpush1.msra.mxu0 0.0
      %153 = vmatprep.subr.mxu0 0.0
      %154 = vmatpush1.msra.mxu0 0.0
      %155 = vmatprep.subr.mxu0 0.0
      %156 = vmatpush1.msra.mxu0 0.0
      %157 = vmatprep.subr.mxu0 0.0
      %158 = vmatpush1.msra.mxu0 0.0
      %159 = vmatprep.subr.mxu0 0.0
      %160 = vmatpush1.msra.mxu0 0.0
      %161 = vmatprep.subr.mxu0 0.0
      %162 = vmatpush1.msra.mxu0 0.0
      %163 = vmatprep.subr.mxu0 0.0
      %164 = vmatpush1.msra.mxu0 0.0
      %165 = vmatprep.subr.mxu0 0.0
      %166 = vmatpush1.msra.mxu0 0.0
      %167 = vmatprep.subr.mxu0 0.0
      %168 = vmatpush1.msra.mxu0 0.0
      %169 = vmatprep.subr.mxu0 0.0
      %170 = vmatpush1.msra.mxu0 0.0
      %171 = vmatprep.subr.mxu0 0.0
      %172 = vmatpush1.msra.mxu0 0.0
      %173 = vmatprep.subr.mxu0 0.0
      %174 = vmatpush1.msra.mxu0 0.0
      %175 = vmatprep.subr.mxu0 0.0
      %176 = vmatpush1.msra.mxu0 0.0
      %177 = vmatprep.subr.mxu0 0.0
      %178 = vmatpush1.msra.mxu0 0.0
      %179 = vmatprep.subr.mxu0 0.0
      %180 = vmatpush1.msra.mxu0 0.0
      %181 = vmatprep.subr.mxu0 0.0
      %182 = vmatpush1.msra.mxu0 0.0
      %183 = vmatprep.subr.mxu0 0.0
      %184 = vmatpush1.msra.mxu0 0.0
      %185 = vmatprep.subr.mxu0 0.0
      %186 = vmatpush1.msra.mxu0 0.0
      %187 = vmatprep.subr.mxu0 0.0
      %188 = vmatpush1.msra.mxu0 0.0
      %189 = vmatprep.mubr.f32.mxu0 0.0
      %190 = vmatmul.mubr.f32.gmra.mrb[0].mxu0 %v120
      %v191 = vpop.f32.mrb[0].mxu0
      %v192 = vadd.f32 0.0, %v191
      %v193 = vpop.f32.mrb[0].mxu0
      %194 = vmatprep.mubr.f32.mxu0 0.0
      %195 = vmatmul.mubr.f32.gmra.mrb[0].mxu0 %v123
      %v196 = vpop.f32.mrb[0].mxu0
      %v197 = vadd.f32 0.0, %v196
      %v198 = vpop.f32.mrb[0].mxu0
      %199 = vdwg.mxu0
      %v200 = vmul.f32 %v192, 0.001
      %v201 = vmul.f32 %v197, 0.001
      %v202 = vadd.f32 %v25, %v200
      %v203 = vadd.f32 %v26, %v201
      %204 = vst.msk [vmem:[#allocation2] sm:$0xff] %vm31, %v202
      %205 = vst.msk [vmem:[#allocation2 + $0x8] sm:$0xff] %vm31, %v203
    $region25: #{tpu_custom_call.1} parent=1 // pred_fallthru
      _
    %v206 = vld [vmem:[#allocation2] sm:$0xff]
    %v207 = vld [vmem:[#allocation2 + $0x8] sm:$0xff]
    %v208 = vld [vmem:[%s4] sm:$0xff]
    %v209 = vld [vmem:[%s4 + $0x8] sm:$0xff]
    %v210 = vld [vmem:[%s4 + $0x10] sm:$0xff]
    %v211 = vld [vmem:[%s4 + $0x18] sm:$0xff]
    %v212 = vld [vmem:[%s4 + $0x20] sm:$0xff]
    %v213 = vld [vmem:[%s4 + $0x28] sm:$0xff]
    %v214 = vld [vmem:[%s4 + $0x30] sm:$0xff]
    %v215 = vld [vmem:[%s4 + $0x38] sm:$0xff]
    %v216 = vld [vmem:[%s4 + $0x40] sm:$0xff]
    %v217 = vld [vmem:[%s4 + $0x48] sm:$0xff]
    %v218 = vld [vmem:[%s4 + $0x50] sm:$0xff]
    %v219 = vld [vmem:[%s4 + $0x58] sm:$0xff]
    %v220 = vld [vmem:[%s4 + $0x60] sm:$0xff]
    %v221 = vld [vmem:[%s4 + $0x68] sm:$0xff]
    %v222 = vld [vmem:[%s4 + $0x70] sm:$0xff]
    %v223 = vld [vmem:[%s4 + $0x78] sm:$0xff]
    %v224 = vld [vmem:[%s4 + $0x80] sm:$0xff]
    %v225 = vld [vmem:[%s4 + $0x88] sm:$0xff]
    %v226 = vld [vmem:[%s4 + $0x90] sm:$0xff]
    %v227 = vld [vmem:[%s4 + $0x98] sm:$0xff]
    %v228 = vld [vmem:[%s4 + $0xa0] sm:$0xff]
    %v229 = vld [vmem:[%s4 + $0xa8] sm:$0xff]
    %v230 = vld [vmem:[%s4 + $0xb0] sm:$0xff]
    %v231 = vld [vmem:[%s4 + $0xb8] sm:$0xff]
    %v232 = vld [vmem:[%s4 + $0xc0] sm:$0xff]
    %v233 = vld [vmem:[%s4 + $0xc8] sm:$0xff]
    %v234 = vld [vmem:[%s4 + $0xd0] sm:$0xff]
    %v235 = vld [vmem:[%s4 + $0xd8] sm:$0xff]
    %v236 = vld [vmem:[%s4 + $0xe0] sm:$0xff]
    %v237 = vld [vmem:[%s4 + $0xe8] sm:$0xff]
    %v238 = vld [vmem:[%s4 + $0xf0] sm:$0xff]
    %v239 = vld [vmem:[%s4 + $0xf8] sm:$0xff]
    %vm240 = vcmask 261120
    %v242 = vsel %vm240, %v206, 0
    %v245 = vsel %vm240, %v207, 0
    %v248 = vsel %vm240, %v208, 0
    %v251 = vsel %vm240, %v209, 0
    %v254 = vsel %vm240, %v210, 0
    %v257 = vsel %vm240, %v211, 0
    %v260 = vsel %vm240, %v212, 0
    %v263 = vsel %vm240, %v213, 0
    %v266 = vsel %vm240, %v214, 0
    %v269 = vsel %vm240, %v215, 0
    %v272 = vsel %vm240, %v216, 0
    %v275 = vsel %vm240, %v217, 0
    %v278 = vsel %vm240, %v218, 0
    %v281 = vsel %vm240, %v219, 0
    %v284 = vsel %vm240, %v220, 0
    %v287 = vsel %vm240, %v221, 0
    %v290 = vsel %vm240, %v222, 0
    %v293 = vsel %vm240, %v223, 0
    %v296 = vsel %vm240, %v224, 0
    %v299 = vsel %vm240, %v225, 0
    %v302 = vsel %vm240, %v226, 0
    %v305 = vsel %vm240, %v227, 0
    %v308 = vsel %vm240, %v228, 0
    %v311 = vsel %vm240, %v229, 0
    %v314 = vsel %vm240, %v230, 0
    %v317 = vsel %vm240, %v231, 0
    %v320 = vsel %vm240, %v232, 0
    %v323 = vsel %vm240, %v233, 0
    %v326 = vsel %vm240, %v234, 0
    %v329 = vsel %vm240, %v235, 0
    %v332 = vsel %vm240, %v236, 0
    %v335 = vsel %vm240, %v237, 0
    %v338 = vsel %vm240, %v238, 0
    %v341 = vsel %vm240, %v239, 0
    %343 = vmatprep.subr.mxu0 0.0
    %344 = vmatpush1.xpose.msra.mxu0 %v248
    %345 = vmatprep.subr.mxu0 0.0
    %346 = vmatpush1.xpose.msra.mxu0 %v251
    %347 = vmatprep.subr.mxu0 0.0
    %348 = vmatpush1.xpose.msra.mxu0 %v254
    %349 = vmatprep.subr.mxu0 0.0
    %350 = vmatpush1.xpose.msra.mxu0 %v257
    %351 = vmatprep.subr.mxu0 0.0
    %352 = vmatpush1.xpose.msra.mxu0 %v260
    %353 = vmatprep.subr.mxu0 0.0
    %354 = vmatpush1.xpose.msra.mxu0 %v263
    %355 = vmatprep.subr.mxu0 0.0
    %356 = vmatpush1.xpose.msra.mxu0 %v266
    %357 = vmatprep.subr.mxu0 0.0
    %358 = vmatpush1.xpose.msra.mxu0 %v269
    %359 = vmatprep.subr.mxu0 0.0
    %360 = vmatpush1.xpose.msra.mxu0 %v272
    %361 = vmatprep.subr.mxu0 0.0
    %362 = vmatpush1.xpose.msra.mxu0 %v275
    %363 = vmatprep.subr.mxu0 0.0
    %364 = vmatpush1.xpose.msra.mxu0 %v278
    %365 = vmatprep.subr.mxu0 0.0
    %366 = vmatpush1.xpose.msra.mxu0 %v281
    %367 = vmatprep.subr.mxu0 0.0
    %368 = vmatpush1.xpose.msra.mxu0 %v284
    %369 = vmatprep.subr.mxu0 0.0
    %370 = vmatpush1.xpose.msra.mxu0 %v287
    %371 = vmatprep.subr.mxu0 0.0
    %372 = vmatpush1.xpose.msra.mxu0 %v290
    %373 = vmatprep.subr.mxu0 0.0
    %374 = vmatpush1.xpose.msra.mxu0 %v293
    %375 = vmatprep.subr.mxu0 0.0
    %376 = vmatpush1.xpose.msra.mxu0 %v296
    %377 = vmatprep.subr.mxu0 0.0
    %378 = vmatpush1.xpose.msra.mxu0 %v299
    %379 = vmatprep.subr.mxu0 0.0
    %380 = vmatpush1.xpose.msra.mxu0 %v302
    %381 = vmatprep.subr.mxu0 0.0
    %382 = vmatpush1.xpose.msra.mxu0 %v305
    %383 = vmatprep.subr.mxu0 0.0
    %384 = vmatpush1.xpose.msra.mxu0 %v308
    %385 = vmatprep.subr.mxu0 0.0
    %386 = vmatpush1.xpose.msra.mxu0 %v311
    %387 = vmatprep.subr.mxu0 0.0
    %388 = vmatpush1.xpose.msra.mxu0 %v314
    %389 = vmatprep.subr.mxu0 0.0
    %390 = vmatpush1.xpose.msra.mxu0 %v317
    %391 = vmatprep.subr.mxu0 0.0
    %392 = vmatpush1.xpose.msra.mxu0 %v320
    %393 = vmatprep.subr.mxu0 0.0
    %394 = vmatpush1.xpose.msra.mxu0 %v323
    %395 = vmatprep.subr.mxu0 0.0
    %396 = vmatpush1.xpose.msra.mxu0 %v326
    %397 = vmatprep.subr.mxu0 0.0
    %398 = vmatpush1.xpose.msra.mxu0 %v329
    %399 = vmatprep.subr.mxu0 0.0
    %400 = vmatpush1.xpose.msra.mxu0 %v332
    %401 = vmatprep.subr.mxu0 0.0
    %402 = vmatpush1.xpose.msra.mxu0 %v335
    %403 = vmatprep.subr.mxu0 0.0
    %404 = vmatpush1.xpose.msra.mxu0 %v338
    %405 = vmatprep.subr.mxu0 0.0
    %406 = vmatpush1.xpose.msra.mxu0 %v341
    %407 = vmatprep.mubr.f32.mxu0 0.0
    %408 = vmatmul.mubr.f32.gmra.mrb[0].mxu0 %v242
    %v409 = vpop.f32.mrb[0].mxu0
    %v410 = vadd.f32 0.0, %v409
    %v411 = vpop.f32.mrb[0].mxu0
    %v412 = vadd.f32 0.0, %v411
    %413 = vmatprep.mubr.f32.mxu0 0.0
    %414 = vmatmul.mubr.f32.gmra.mrb[0].mxu0 %v245
    %v415 = vpop.f32.mrb[0].mxu0
    %v416 = vadd.f32 0.0, %v415
    %v417 = vpop.f32.mrb[0].mxu0
    %v418 = vadd.f32 0.0, %v417
    %419 = vdwg.mxu0
    %420 = vst [vmem:[#allocation3] sm:$0xff] %v410
    %421 = vst [vmem:[#allocation3 + $0x8] sm:$0xff] %v412
    %422 = vst [vmem:[#allocation3 + $0x10] sm:$0xff] %v416
    %423 = vst [vmem:[#allocation3 + $0x18] sm:$0xff] %v418
    // Predicated region
    $region26: #{tpu_custom_call.1} parent=1 // pred_check
      _
    $region27: #{tpu_custom_call.1} parent=1 // pred_check_branch
      %425 = sbr.rel (0) target = $region29
    $region28: #{tpu_custom_call.1} parent=1 // pred_region
      %s427 = ssub.s32 512, 512
      %428 = vsyncadd [#allocation4], %s427
      %s429 = sshll.u32 [#allocation3], 4
      %s430 = int_to_ptr.vmem [resolvable:$true] %s429
      %435 = dma.vmem_to_hbm [thread:$0]  %s430, 512, %s5, [#allocation4], 256, 256, 16
    $region29: #{tpu_custom_call.1} parent=1 // pred_fallthru
      _
    // Predicated region
    $region30: #{tpu_custom_call.1} parent=1 // pred_check
      _
    $region31: #{tpu_custom_call.1} parent=1 // pred_check_branch
      %437 = sbr.rel (0) target = $region33
    $region32: #{tpu_custom_call.1} parent=1 // pred_region
      %438 = dma.done [#allocation4], 512
    $region33: #{tpu_custom_call.1} parent=1 // pred_fallthru
      _
    %439 = vsyncpa [#allocation4], 1

</llo_original>
